<compile_context>
chip_gen: v6e
topology: v6e:2x2x1
jax: 0.10.0
libtpu: 0.0.40
codegen_flags: <defaults>
</compile_context>

<pallas_src>
import jax
import jax.numpy as jnp
from jax import lax
from jax.experimental import pallas as pl
from jax.experimental.pallas import tpu as pltpu


def _sparse_kernel_2d_body(xc_ref, wc_ref, wlo_ref, blo_ref, o_ref):
    # xc_ref : (9*Cin+1, S_blk)  im2col columns (+ ones row for conv bias)
    # wc_ref : (Cmid, 9*Cin+1)   conv weight (bias folded in last column)
    # wlo_ref: (Cout, Cmid)      Lo weight
    # blo_ref: (Cout, 1)         Lo bias (broadcast across lanes)
    # o_ref  : (Cout, S_blk)     lane-dense output slab
    h = jnp.dot(wc_ref[...], xc_ref[...], preferred_element_type=jnp.float32)
    h = jnp.maximum(h, 0.0)                                   # ReLU
    out = jnp.dot(wlo_ref[...], h, preferred_element_type=jnp.float32)
    out = out + blo_ref[...]
    o_ref[...] = out.astype(o_ref.dtype)


def _pick_lane_block(s_total):
    """Pick a lane-dense column block (multiple of 128) dividing s_total."""
    if s_total % 128 != 0:
        return s_total                      # fall back: one full-width block
    blk = min(s_total, 4096)                # keep per-step VMEM small
    while s_total % blk != 0:
        blk -= 128
    if blk == s_total and s_total >= 256 and (s_total // 2) % 128 == 0:
        blk = s_total // 2                  # >=2 parallel steps (v7x megacore)
    return blk


def sparse_kernel_2d(x, wconv, bconv, wlo, blo, *, k, c):
    """Forward pass of sparseKernel2d.

    x:     (B, Nx, Ny, c, ich)  with ich == k**2 (required by the PyTorch module)
    wconv: (Cmid, Cin, 3, 3)    PyTorch Conv2d weight layout (och, ich, kh, kw)
    bconv: (Cmid,)
    wlo:   (Cout, Cmid)         PyTorch Linear weight layout (out, in)
    blo:   (Cout,)
    """
    B, Nx, Ny, cc, ich = x.shape
    assert cc == c and ich == k ** 2
    Cin = c * ich
    Cmid = wconv.shape[0]
    Cout = wlo.shape[0]
    S = B * Nx * Ny
    K9 = 9 * Cin + 1                        # 9 taps * Cin features + ones row

    # ---------------- wrapper glue (plain JAX / XLA) ----------------
    x_flat = x.reshape(B, Nx, Ny, Cin).astype(jnp.float32)
    x_pad = jnp.pad(x_flat, ((0, 0), (1, 1), (1, 1), (0, 0)))    # (B, Nx+2, Ny+2, Cin)

    # im2col: one column per output pixel, feature index = tap*Cin + cin
    taps = [x_pad[:, dh:dh + Nx, dw:dw + Ny, :]
            for dh in range(3) for dw in range(3)]               # 9 x (B,Nx,Ny,Cin)
    x_col = jnp.stack(taps, axis=3).reshape(S, 9 * Cin).T        # (9*Cin, S)
    x_col = jnp.concatenate(
        [x_col, jnp.ones((1, S), jnp.float32)], axis=0)          # (K9, S)

    # conv weight -> (Cmid, 9*Cin) matching the (tap, cin) column ordering,
    # with the conv bias folded in as the last column.
    w_col = jnp.transpose(wconv, (0, 2, 3, 1)).reshape(Cmid, 9 * Cin)
    w_col = jnp.concatenate(
        [w_col, bconv.reshape(Cmid, 1)], axis=1).astype(jnp.float32)   # (Cmid, K9)

    wlo_k = wlo.astype(jnp.float32)                              # (Cout, Cmid)
    blo_k = blo.reshape(Cout, 1).astype(jnp.float32)             # (Cout, 1)

    # ---------------- pallas_call ----------------
    s_blk = _pick_lane_block(S)
    n_blk = S // s_blk

    out = pl.pallas_call(
        _sparse_kernel_2d_body,
        out_shape=jax.ShapeDtypeStruct((Cout, S), jnp.float32),
        grid_spec=pltpu.PrefetchScalarGridSpec(
            num_scalar_prefetch=0,
            grid=(n_blk,),
            in_specs=[
                pl.BlockSpec((K9, s_blk), lambda s: (0, s)),
                pl.BlockSpec((Cmid, K9), lambda s: (0, 0)),
                pl.BlockSpec((Cout, Cmid), lambda s: (0, 0)),
                pl.BlockSpec((Cout, 1), lambda s: (0, 0)),
            ],
            out_specs=pl.BlockSpec((Cout, s_blk), lambda s: (0, s)),
        ),
        compiler_params=pltpu.CompilerParams(
            dimension_semantics=("parallel",)),
    )(x_col, w_col, wlo_k, blo_k)

    # (Cout, S) -> (B, Nx, Ny, c, ich); Cout == c*ich
    return out.T.reshape(B, Nx, Ny, c, ich)


def _reference(x, wconv, bconv, wlo, blo, *, k, c):
    """Pure-JAX reference (mirrors the PyTorch forward) for validation."""
    B, Nx, Ny, cc, ich = x.shape
    Cin = cc * ich
    x_flat = x.reshape(B, Nx, Ny, Cin).astype(jnp.float32)
    w_hwio = jnp.transpose(wconv, (2, 3, 1, 0))                  # (3,3,Cin,Cmid)
    y = lax.conv_general_dilated(
        x_flat, w_hwio, window_strides=(1, 1), padding="SAME",
        dimension_numbers=("NHWC", "HWIO", "NHWC"))
    y = jnp.maximum(y + bconv, 0.0)
    y = y @ wlo.T + blo
    return y.reshape(B, Nx, Ny, cc, ich)


if __name__ == "__main__":
    # Module hyperparameters: forward requires ich == k**2.
    k, c, alpha = 2, 1, 2
    ich = k ** 2                    # 4
    Cin = c * k ** 2                # conv in channels  = 4
    Cmid = alpha * k ** 2           # conv out channels = 8
    Cout = c * k ** 2               # Lo out features   = 4

    B, Nx, Ny = 2, 16, 16

    key = jax.random.PRNGKey(0)
    kx, kw1, kb1, kw2, kb2 = jax.random.split(key, 5)
    x = jax.random.normal(kx, (B, Nx, Ny, c, ich), dtype=jnp.float32)
    wconv = jax.random.normal(kw1, (Cmid, Cin, 3, 3), dtype=jnp.float32) * 0.1
    bconv = jax.random.normal(kb1, (Cmid,), dtype=jnp.float32) * 0.1
    wlo = jax.random.normal(kw2, (Cout, Cmid), dtype=jnp.float32) * 0.1
    blo = jax.random.normal(kb2, (Cout,), dtype=jnp.float32) * 0.1

    out = sparse_kernel_2d(x, wconv, bconv, wlo, blo, k=k, c=c)
    out = jax.block_until_ready(out)

    ref = _reference(x, wconv, bconv, wlo, blo, k=k, c=c)
    assert out.shape == (B, Nx, Ny, c, ich)
    assert jnp.allclose(out, ref, atol=1e-4, rtol=1e-4)

    print("KERNEL_OK")
</pallas_src>

<mosaic_0001>
module attributes {stable_mosaic.version = 11 : i64} {
  func.func @_sparse_kernel_2d_body(%arg0: i32, %arg1: memref<37x256xf32, #tpu.memory_space<vmem>>, %arg2: memref<8x37xf32, #tpu.memory_space<vmem>>, %arg3: memref<4x8xf32, #tpu.memory_space<vmem>>, %arg4: memref<4x1xf32, #tpu.memory_space<vmem>>, %arg5: memref<4x256xf32, #tpu.memory_space<vmem>>) attributes {dimension_semantics = [#tpu.dimension_semantics<parallel>], iteration_bounds = array<i64: 2>, scalar_prefetch = 0 : i64, scratch_operands = 0 : i64, tpu.core_type = #tpu.core_type<tc>, window_params = [{transform_indices = @transform_0, window_bounds = array<i64: 37, 256>}, {pipeline_mode = #tpu.pipeline_mode<synchronous>, transform_indices = @transform_1, window_bounds = array<i64: 8, 37>}, {pipeline_mode = #tpu.pipeline_mode<synchronous>, transform_indices = @transform_2, window_bounds = array<i64: 4, 8>}, {pipeline_mode = #tpu.pipeline_mode<synchronous>, transform_indices = @transform_3, window_bounds = array<i64: 4, 1>}, {transform_indices = @transform_4, window_bounds = array<i64: 4, 256>}]} {
    %c0 = arith.constant 0 : index
    %c0_0 = arith.constant 0 : index
    %0 = vector.load %arg2[%c0, %c0_0] : memref<8x37xf32, #tpu.memory_space<vmem>>, vector<8x37xf32>
    %c0_1 = arith.constant 0 : index
    %c0_2 = arith.constant 0 : index
    %1 = vector.load %arg1[%c0_1, %c0_2] : memref<37x256xf32, #tpu.memory_space<vmem>>, vector<37x256xf32>
    %cst = arith.constant dense<0.000000e+00> : vector<8x256xf32>
    %2 = tpu.matmul %0, %1, %cst {dimension_numbers = #tpu.dot_dimension_numbers<[1], [0], [0], [1], [0, 0, 1, 1], [], []>} : vector<8x37xf32>, vector<37x256xf32>, vector<8x256xf32> -> vector<8x256xf32>
    %cst_3 = arith.constant 0.000000e+00 : f32
    %3 = vector.broadcast %cst_3 : f32 to vector<8x256xf32>
    %4 = arith.maximumf %2, %3 : vector<8x256xf32>
    %c0_4 = arith.constant 0 : index
    %c0_5 = arith.constant 0 : index
    %5 = vector.load %arg3[%c0_4, %c0_5] : memref<4x8xf32, #tpu.memory_space<vmem>>, vector<4x8xf32>
    %cst_6 = arith.constant dense<0.000000e+00> : vector<4x256xf32>
    %6 = tpu.matmul %5, %4, %cst_6 {dimension_numbers = #tpu.dot_dimension_numbers<[1], [0], [0], [1], [0, 0, 1, 1], [], []>} : vector<4x8xf32>, vector<8x256xf32>, vector<4x256xf32> -> vector<4x256xf32>
    %c0_7 = arith.constant 0 : index
    %c0_8 = arith.constant 0 : index
    %7 = vector.load %arg4[%c0_7, %c0_8] : memref<4x1xf32, #tpu.memory_space<vmem>>, vector<4x1xf32>
    %8 = vector.broadcast %7 : vector<4x1xf32> to vector<4x256xf32>
    %9 = arith.addf %6, %8 : vector<4x256xf32>
    %c0_9 = arith.constant 0 : index
    %c0_10 = arith.constant 0 : index
    %10 = vector.load %arg5[%c0_9, %c0_10] : memref<4x256xf32, #tpu.memory_space<vmem>>, vector<4x256xf32>
    tpu.vector_store %arg5[%c0_9, %c0_10], %9 {strides = array<i32>} : memref<4x256xf32, #tpu.memory_space<vmem>>, vector<4x256xf32>,
    return
  }
  func.func @transform_0(%arg0: i32) -> (i32, i32) {
    %c0_i32 = arith.constant 0 : i32
    %c0_i32_0 = arith.constant 0 : i32
    return %c0_i32, %arg0 : i32, i32
  }
  func.func @transform_1(%arg0: i32) -> (i32, i32) {
    %c0_i32 = arith.constant 0 : i32
    %c0_i32_0 = arith.constant 0 : i32
    %c0_i32_1 = arith.constant 0 : i32
    return %c0_i32, %c0_i32_0 : i32, i32
  }
  func.func @transform_2(%arg0: i32) -> (i32, i32) {
    %c0_i32 = arith.constant 0 : i32
    %c0_i32_0 = arith.constant 0 : i32
    %c0_i32_1 = arith.constant 0 : i32
    return %c0_i32, %c0_i32_0 : i32, i32
  }
  func.func @transform_3(%arg0: i32) -> (i32, i32) {
    %c0_i32 = arith.constant 0 : i32
    %c0_i32_0 = arith.constant 0 : i32
    %c0_i32_1 = arith.constant 0 : i32
    return %c0_i32, %c0_i32_0 : i32, i32
  }
  func.func @transform_4(%arg0: i32) -> (i32, i32) {
    %c0_i32 = arith.constant 0 : i32
    %c0_i32_0 = arith.constant 0 : i32
    return %c0_i32, %arg0 : i32, i32
  }
}

</mosaic_0001>

<llo_original>
// kernel: tpu_custom_call.1
$region0: #{tpu_custom_call.1}
  #allocation0 [shape = 'u32[]', space=smem, size = 0x4, offset = 0x4, fixed_abs, tag = 'smem constant byte address 0x4 - core index']
  #allocation1 [shape = 'u32[144,128]{1,0:T(1,128)}', space=vmem, size = 0x12000, scoped, tag = 'internal scratch']
  %s0 = inlined_call_operand.hbm [shape: f32[37,512], index: 0, kind: input, shape index: {}]
  %s1 = inlined_call_operand.hbm [shape: f32[8,37], index: 1, kind: input, shape index: {}]
  %s2 = inlined_call_operand.vmem [shape: f32[4,8], index: 2, kind: input, shape index: {}]
  %s3 = inlined_call_operand.vmem [shape: f32[4,1], index: 3, kind: input, shape index: {}]
  %s4 = inlined_call_operand.hbm [shape: f32[4,512], index: 4, kind: output, shape index: {}]
  %s5 = sld [smem:[#allocation0]]
  $region57: #{tpu_custom_call.1} parent=0
    _
  %s7 = ssub.s32 1, %s5
  %s8 = scalar_select 0, %s7, %s5
  $region1: #{tpu_custom_call.1} parent=0
    #allocation2 [shape = 'u8[81920]{0}', space=vmem, size = 0x14000, scoped, tag = 'input window, operand 0']
    #allocation3 [shape = 's32[2]{0}', space=sflag, size = 0x8, scoped, tag = 'scoped memory for tpu_custom_call.1']
    #allocation4 [shape = 's32[2]{0}', space=sflag, size = 0x8, scoped, tag = 'scoped memory for tpu_custom_call.1']
    #allocation5 [shape = 'u8[4096]{0}', space=vmem, size = 0x1000, scoped, tag = 'input window, operand 1, single buffered']
    #allocation6 [shape = 's32[1]{0}', space=sflag, size = 0x4, scoped, tag = 'scoped memory for tpu_custom_call.1']
    #allocation7 [shape = 'u8[8192]{0}', space=vmem, size = 0x2000, scoped, tag = 'output window, operand 0']
    %9 = vsyncpa [#allocation3], 0
    %s10 = scalar_lea.sflag [#allocation3], 1
    %11 = vsyncpa %s10, 0
    %12 = vsyncpa [#allocation6], 0
    %13 = vsyncpa [#allocation4], 0
    %s14 = scalar_lea.sflag [#allocation4], 1
    %15 = vsyncpa %s14, 0
    loop: start=0, step=1, limit=4
    $region2: #{tpu_custom_call.1} parent=1 // loop_pre_header
      _
    $region3: #{tpu_custom_call.1} parent=1 // loop_header
      %s17 = sphi 0, %s21
      %p18 = scmp.ge.s32.totalorder %s17, 4
      %s27 = sphi 0, %s29
      %s30 = sphi 0, %s27
      %s31 = sphi 0, %s30
      %s47 = sphi 0, %s31
      %s51 = sphi 0, %s51
      %s53 = sphi 0, %s51
      %s54 = sphi 0, %s53
      %s68 = sphi 0, %s54
      %s72 = sphi 0, %s72
      %s74 = sphi 0, %s72
      %s75 = sphi 0, %s74
      %s89 = sphi 0, %s75
      %s93 = sphi 0, %s93
      %s95 = sphi 0, %s93
      %s96 = sphi 0, %s95
      %s110 = sphi 0, %s96
      %s116 = sphi 0, %s118
      %s119 = sphi 0, %s116
      %s120 = sphi 0, %s119
      %s136 = sphi 0, %s120
    $region4: #{tpu_custom_call.1} parent=1 // loop_header_branch
      %20 = sbr.rel (%p18) target = $region8
    $region5: #{tpu_custom_call.1} parent=1 // loop_body
      %s22 = ssub.s32 %s17, 1
      %s23 = ssub.s32 %s17, 2
      %s24 = sadd.s32 %s17, 1
      %s25 = ssub.s32 %s17, %s24
      %p26 = scmp.eq.s32.totalorder %s25, 0
      %s28 = sadd.s32 %s27, 1
      %s29 = scalar_select %p26, %s27, %s28
      %p32 = pneg %p26
      %p33 = scmp.eq.s32.totalorder %s17, 1
      %p34 = por %p32, %p33
      %p35 = scmp.ne.s32.totalorder %s27, %s30
      %p36 = scmp.eq.s32.totalorder %s17, 0
      %p37 = por %p35, %p36
      %p38 = scmp.ne.s32.totalorder %s27, %s30
      %p39 = scmp.eq.s32.totalorder %s22, 1
      %p40 = por %p38, %p39
      %p41 = scmp.ne.s32.totalorder %s30, %s31
      %p42 = scmp.eq.s32.totalorder %s22, 0
      %p43 = por %p41, %p42
      %p44 = scmp.ne.s32.totalorder %s30, %s31
      %p45 = scmp.eq.s32.totalorder %s23, 1
      %p46 = por %p44, %p45
      %p48 = scmp.ne.s32.totalorder %s31, %s47
      %p49 = scmp.eq.s32.totalorder %s23, 0
      %p50 = por %p48, %p49
      %s52 = sadd.s32 %s51, 1
      %p55 = scmp.eq.s32.totalorder %s17, 1
      %p56 = scmp.ne.s32.totalorder %s51, %s53
      %p57 = scmp.eq.s32.totalorder %s17, 0
      %p58 = por %p56, %p57
      %p59 = scmp.ne.s32.totalorder %s51, %s53
      %p60 = scmp.eq.s32.totalorder %s22, 1
      %p61 = por %p59, %p60
      %p62 = scmp.ne.s32.totalorder %s53, %s54
      %p63 = scmp.eq.s32.totalorder %s22, 0
      %p64 = por %p62, %p63
      %p65 = scmp.ne.s32.totalorder %s53, %s54
      %p66 = scmp.eq.s32.totalorder %s23, 1
      %p67 = por %p65, %p66
      %p69 = scmp.ne.s32.totalorder %s54, %s68
      %p70 = scmp.eq.s32.totalorder %s23, 0
      %p71 = por %p69, %p70
      %s73 = sadd.s32 %s72, 1
      %p76 = scmp.eq.s32.totalorder %s17, 1
      %p77 = scmp.ne.s32.totalorder %s72, %s74
      %p78 = scmp.eq.s32.totalorder %s17, 0
      %p79 = por %p77, %p78
      %p80 = scmp.ne.s32.totalorder %s72, %s74
      %p81 = scmp.eq.s32.totalorder %s22, 1
      %p82 = por %p80, %p81
      %p83 = scmp.ne.s32.totalorder %s74, %s75
      %p84 = scmp.eq.s32.totalorder %s22, 0
      %p85 = por %p83, %p84
      %p86 = scmp.ne.s32.totalorder %s74, %s75
      %p87 = scmp.eq.s32.totalorder %s23, 1
      %p88 = por %p86, %p87
      %p90 = scmp.ne.s32.totalorder %s75, %s89
      %p91 = scmp.eq.s32.totalorder %s23, 0
      %p92 = por %p90, %p91
      %s94 = sadd.s32 %s93, 1
      %p97 = scmp.eq.s32.totalorder %s17, 1
      %p98 = scmp.ne.s32.totalorder %s93, %s95
      %p99 = scmp.eq.s32.totalorder %s17, 0
      %p100 = por %p98, %p99
      %p101 = scmp.ne.s32.totalorder %s93, %s95
      %p102 = scmp.eq.s32.totalorder %s22, 1
      %p103 = por %p101, %p102
      %p104 = scmp.ne.s32.totalorder %s95, %s96
      %p105 = scmp.eq.s32.totalorder %s22, 0
      %p106 = por %p104, %p105
      %p107 = scmp.ne.s32.totalorder %s95, %s96
      %p108 = scmp.eq.s32.totalorder %s23, 1
      %p109 = por %p107, %p108
      %p111 = scmp.ne.s32.totalorder %s96, %s110
      %p112 = scmp.eq.s32.totalorder %s23, 0
      %p113 = por %p111, %p112
      %s114 = ssub.s32 %s17, %s24
      %p115 = scmp.eq.s32.totalorder %s114, 0
      %s117 = sadd.s32 %s116, 1
      %s118 = scalar_select %p115, %s116, %s117
      %p121 = pneg %p115
      %p122 = scmp.eq.s32.totalorder %s17, 1
      %p123 = por %p121, %p122
      %p124 = scmp.ne.s32.totalorder %s116, %s119
      %p125 = scmp.eq.s32.totalorder %s17, 0
      %p126 = por %p124, %p125
      %p127 = scmp.ne.s32.totalorder %s116, %s119
      %p128 = scmp.eq.s32.totalorder %s22, 1
      %p129 = por %p127, %p128
      %p130 = scmp.ne.s32.totalorder %s119, %s120
      %p131 = scmp.eq.s32.totalorder %s22, 0
      %p132 = por %p130, %p131
      %p133 = scmp.ne.s32.totalorder %s119, %s120
      %p134 = scmp.eq.s32.totalorder %s23, 1
      %p135 = por %p133, %p134
      %p137 = scmp.ne.s32.totalorder %s120, %s136
      %p138 = scmp.eq.s32.totalorder %s23, 0
      %p139 = por %p137, %p138
      %p140 = scmp.le.s32.totalorder 1, %s17
      %p141 = scmp.lt.s32.totalorder %s17, 3
      %p142 = pnand %p140, %p141
      %p143 = pneg %p142
      // Predicated region
      $region9: #{tpu_custom_call.1} parent=5 // pred_check
        _
      $region10: #{tpu_custom_call.1} parent=5 // pred_check_branch
        %145 = sbr.rel (%p142) target = $region12
      $region11: #{tpu_custom_call.1} parent=5 // pred_region
        %s146 = ssub.s32 %s17, 1
        // Predicated region
        $region13: #{tpu_custom_call.1} parent=11 // pred_check
          %p147 = pneg %p64
        $region14: #{tpu_custom_call.1} parent=11 // pred_check_branch
          %149 = sbr.rel (%p147) target = $region16
        $region15: #{tpu_custom_call.1} parent=11 // pred_region
          %s151 = ssub.s32 128, 128
          %152 = vsyncadd [#allocation6], %s151
          %s154 = sshll.u32 [#allocation5], 4
          %s155 = int_to_ptr.vmem [resolvable:$true] %s154
          %157 = dma.hbm_to_vmem [thread:$0]  %s1, 128, %s155, [#allocation6]
        $region16: #{tpu_custom_call.1} parent=11 // pred_fallthru
          _
        // Predicated region
        $region17: #{tpu_custom_call.1} parent=11 // pred_check
          %p158 = pneg %p85
        $region18: #{tpu_custom_call.1} parent=11 // pred_check_branch
          %160 = sbr.rel (%p158) target = $region20
        $region19: #{tpu_custom_call.1} parent=11 // pred_region
          _
        $region20: #{tpu_custom_call.1} parent=11 // pred_fallthru
          _
        // Predicated region
        $region21: #{tpu_custom_call.1} parent=11 // pred_check
          %p161 = pneg %p106
        $region22: #{tpu_custom_call.1} parent=11 // pred_check_branch
          %163 = sbr.rel (%p161) target = $region24
        $region23: #{tpu_custom_call.1} parent=11 // pred_region
          _
        $region24: #{tpu_custom_call.1} parent=11 // pred_fallthru
          _
      $region12: #{tpu_custom_call.1} parent=5 // pred_fallthru
        _
      %p164 = scmp.lt.s32.totalorder %s17, 2
      // Predicated region
      $region25: #{tpu_custom_call.1} parent=5 // pred_check
        %p165 = pneg %p164
      $region26: #{tpu_custom_call.1} parent=5 // pred_check_branch
        %167 = sbr.rel (%p165) target = $region28
      $region27: #{tpu_custom_call.1} parent=5 // pred_region
        // Predicated region
        $region29: #{tpu_custom_call.1} parent=27 // pred_check
          %p168 = pneg %p37
        $region30: #{tpu_custom_call.1} parent=27 // pred_check_branch
          %170 = sbr.rel (%p168) target = $region32
        $region31: #{tpu_custom_call.1} parent=27 // pred_region
          %s171 = sand.u32 %s27, 1
          %s172 = scalar_lea.sflag [#allocation3], %s171
          %s173 = sand.u32 %s27, 1
          %s174 = smul.addr %s173, 80
          %s175 = scalar_lea.vmem [#allocation2], %s174
          %s176 = smul.u32 2, %s17
          %s178 = ssub.s32 1280, 1280
          %179 = vsyncadd %s172, %s178
          %s180 = smul.addr %s176, 128
          %s181 = scalar_lea.hbm %s0, %s180
          %s182 = sshll.u32 %s175, 4
          %s183 = int_to_ptr.vmem [resolvable:$true] %s182
          %188 = dma.hbm_to_vmem [thread:$0]  %s181, 1280, %s183, %s172, 512, 256, 16
        $region32: #{tpu_custom_call.1} parent=27 // pred_fallthru
          _
      $region28: #{tpu_custom_call.1} parent=5 // pred_fallthru
        _
      %p189 = scmp.le.s32.totalorder 1, %s17
      %p190 = scmp.lt.s32.totalorder %s17, 3
      %p191 = pnand %p189, %p190
      %p192 = pneg %p191
      // Predicated region
      $region33: #{tpu_custom_call.1} parent=5 // pred_check
        _
      $region34: #{tpu_custom_call.1} parent=5 // pred_check_branch
        %194 = sbr.rel (%p191) target = $region36
      $region35: #{tpu_custom_call.1} parent=5 // pred_region
        %s195 = ssub.s32 %s17, 1
        %s196 = sand.u32 %s30, 1
        %s197 = scalar_lea.sflag [#allocation3], %s196
        %s198 = sand.u32 %s30, 1
        %s199 = smul.addr %s198, 80
        %s200 = scalar_lea.vmem [#allocation2], %s199
        // Predicated region
        $region37: #{tpu_custom_call.1} parent=35 // pred_check
          %p201 = pneg %p43
        $region38: #{tpu_custom_call.1} parent=35 // pred_check_branch
          %203 = sbr.rel (%p201) target = $region40
        $region39: #{tpu_custom_call.1} parent=35 // pred_region
          %204 = dma.done %s197, 1280
        $region40: #{tpu_custom_call.1} parent=35 // pred_fallthru
          _
        // Predicated region
        $region41: #{tpu_custom_call.1} parent=35 // pred_check
          %p205 = pneg %p64
        $region42: #{tpu_custom_call.1} parent=35 // pred_check_branch
          %207 = sbr.rel (%p205) target = $region44
        $region43: #{tpu_custom_call.1} parent=35 // pred_region
          %208 = dma.done [#allocation6], 128
        $region44: #{tpu_custom_call.1} parent=35 // pred_fallthru
          _
        %s209 = sand.u32 %s30, 1
        %s210 = scalar_lea.sflag [#allocation3], %s209
        %s211 = sand.u32 %s30, 1
        %s212 = smul.addr %s211, 80
        %s213 = scalar_lea.vmem [#allocation2], %s212
        %p214 = pneg %p43
        %p215 = pneg %p40
        %p216 = pneg %p64
        %p217 = pneg %p61
        %p218 = pneg %p85
        %p219 = pneg %p82
        %p220 = pneg %p106
        %p221 = pneg %p103
        %p222 = pneg %p132
        %p223 = pneg %p129
        %s224 = sand.u32 %s119, 1
        %s225 = scalar_lea.sflag [#allocation4], %s224
        %s226 = sand.u32 %s119, 1
        %s227 = smul.addr %s226, 8
        %s228 = scalar_lea.vmem [#allocation7], %s227
        %s229 = smul.u32 2, %s22
        %s230 = smul.u32 2, %s22
        %v231 = vld [vmem:[#allocation5] sm:$0xff]
        %v232 = vld [vmem:[%s200] sm:$0xff]
        %v233 = vld [vmem:[%s200 + $0x8] sm:$0xff]
        %v234 = vld [vmem:[%s200 + $0x10] sm:$0xff]
        %v235 = vld [vmem:[%s200 + $0x18] sm:$0xff]
        %v236 = vld [vmem:[%s200 + $0x20] sm:$0xff]
        %v237 = vld [vmem:[%s200 + $0x28] sm:$0xff]
        %v238 = vld [vmem:[%s200 + $0x30] sm:$0xff]
        %v239 = vld [vmem:[%s200 + $0x38] sm:$0xff]
        %v240 = vld [vmem:[%s200 + $0x40] sm:$0x1f]
        %v241 = vld [vmem:[%s200 + $0x48] sm:$0x1f]
        %vm242 = vcmask 302080
        %v244 = vsel %vm242, %v231, 0
        %vm246 = vcmask 1044480
        %v248 = vsel %vm246, %v240, 0
        %v251 = vsel %vm246, %v241, 0
        %253 = vmatprep.subr.mxu0 0.0
        %254 = vmatpush1.msra.mxu0 0.0
        %255 = vmatprep.subr.mxu0 0.0
        %256 = vmatpush1.msra.mxu0 0.0
        %257 = vmatprep.subr.mxu0 0.0
        %258 = vmatpush1.msra.mxu0 0.0
        %259 = vmatprep.subr.mxu0 0.0
        %260 = vmatpush1.msra.mxu0 0.0
        %261 = vmatprep.subr.mxu0 0.0
        %262 = vmatpush1.msra.mxu0 0.0
        %263 = vmatprep.subr.mxu0 0.0
        %264 = vmatpush1.msra.mxu0 0.0
        %265 = vmatprep.subr.mxu0 0.0
        %266 = vmatpush1.msra.mxu0 0.0
        %267 = vmatprep.subr.mxu0 0.0
        %268 = vmatpush1.msra.mxu0 0.0
        %269 = vmatprep.subr.mxu0 0.0
        %270 = vmatpush1.msra.mxu0 0.0
        %271 = vmatprep.subr.mxu0 0.0
        %272 = vmatpush1.msra.mxu0 0.0
        %273 = vmatprep.subr.mxu0 0.0
        %274 = vmatpush1.msra.mxu0 0.0
        %275 = vmatprep.subr.mxu0 %v251
        %276 = vmatpush1.msra.mxu0 %v248
        %277 = vmatprep.subr.mxu0 %v239
        %278 = vmatpush1.msra.mxu0 %v238
        %279 = vmatprep.subr.mxu0 %v237
        %280 = vmatpush1.msra.mxu0 %v236
        %281 = vmatprep.subr.mxu0 %v235
        %282 = vmatpush1.msra.mxu0 %v234
        %283 = vmatprep.subr.mxu0 %v233
        %284 = vmatpush1.msra.mxu0 %v232
        %285 = vmatprep.subr.mxu0 0.0
        %286 = vmatpush2.msra.mxu0 0.0
        %287 = vmatprep.subr.mxu0 0.0
        %288 = vmatpush2.msra.mxu0 0.0
        %289 = vmatprep.subr.mxu0 0.0
        %290 = vmatpush2.msra.mxu0 0.0
        %291 = vmatprep.subr.mxu0 0.0
        %292 = vmatpush2.msra.mxu0 0.0
        %293 = vmatprep.subr.mxu0 0.0
        %294 = vmatpush2.msra.mxu0 0.0
        %295 = vmatprep.subr.mxu0 0.0
        %296 = vmatpush2.msra.mxu0 0.0
        %297 = vmatprep.subr.mxu0 0.0
        %298 = vmatpush2.msra.mxu0 0.0
        %299 = vmatprep.subr.mxu0 0.0
        %300 = vmatpush2.msra.mxu0 0.0
        %301 = vmatprep.subr.mxu0 0.0
        %302 = vmatpush2.msra.mxu0 0.0
        %303 = vmatprep.subr.mxu0 0.0
        %304 = vmatpush2.msra.mxu0 0.0
        %305 = vmatprep.subr.mxu0 0.0
        %306 = vmatpush2.msra.mxu0 0.0
        %307 = vmatprep.subr.mxu0 0.0
        %308 = vmatpush2.msra.mxu0 0.0
        %309 = vmatprep.subr.mxu0 0.0
        %310 = vmatpush2.msra.mxu0 0.0
        %311 = vmatprep.subr.mxu0 0.0
        %312 = vmatpush2.msra.mxu0 0.0
        %313 = vmatprep.subr.mxu0 0.0
        %314 = vmatpush2.msra.mxu0 0.0
        %315 = vmatprep.subr.mxu0 0.0
        %316 = vmatpush2.msra.mxu0 0.0
        %317 = vmatprep.mubr.f32.mxu0 0.0
        %318 = vmatmul.mubr.f32.gmra.mxu0 %v244
        %v319 = vpop.f32.mrf.mxu0
        %v320 = vadd.f32 0.0, %v319
        %v321 = vpop.f32.mrf.mxu0
        %v322 = vadd.f32 0.0, %v321
        %323 = vdwg.mxu0
        %v324 = vmax.f32 %v320, 0.0
        %v325 = vmax.f32 %v322, 0.0
        %v326 = vld [vmem:[%s2] sm:$0xf]
        %v327 = vld [vmem:[%s3] sm:$0xf]
        %329 = vset.pattern.permute.xlu0 0
        %330 = vperm.xlu0 %329, %v327
        %v331 = vpop.permute.xlu0 %330
        %vm333 = vcmask 64512
        %v335 = vsel %vm333, %v326, 0
        %337 = vmatprep.subr.mxu0 0.0
        %338 = vmatpush1.msra.mxu0 0.0
        %339 = vmatprep.subr.mxu0 0.0
        %340 = vmatpush1.msra.mxu0 0.0
        %341 = vmatprep.subr.mxu0 0.0
        %342 = vmatpush1.msra.mxu0 0.0
        %343 = vmatprep.subr.mxu0 0.0
        %344 = vmatpush1.msra.mxu0 0.0
        %345 = vmatprep.subr.mxu0 0.0
        %346 = vmatpush1.msra.mxu0 0.0
        %347 = vmatprep.subr.mxu0 0.0
        %348 = vmatpush1.msra.mxu0 0.0
        %349 = vmatprep.subr.mxu0 0.0
        %350 = vmatpush1.msra.mxu0 0.0
        %351 = vmatprep.subr.mxu0 0.0
        %352 = vmatpush1.msra.mxu0 0.0
        %353 = vmatprep.subr.mxu0 0.0
        %354 = vmatpush1.msra.mxu0 0.0
        %355 = vmatprep.subr.mxu0 0.0
        %356 = vmatpush1.msra.mxu0 0.0
        %357 = vmatprep.subr.mxu0 0.0
        %358 = vmatpush1.msra.mxu0 0.0
        %359 = vmatprep.subr.mxu0 0.0
        %360 = vmatpush1.msra.mxu0 0.0
        %361 = vmatprep.subr.mxu0 0.0
        %362 = vmatpush1.msra.mxu0 0.0
        %363 = vmatprep.subr.mxu0 0.0
        %364 = vmatpush1.msra.mxu0 0.0
        %365 = vmatprep.subr.mxu0 0.0
        %366 = vmatpush1.msra.mxu0 0.0
        %367 = vmatprep.subr.mxu0 %v325
        %368 = vmatpush1.msra.mxu0 %v324
        %369 = vmatprep.subr.mxu0 0.0
        %370 = vmatpush2.msra.mxu0 0.0
        %371 = vmatprep.subr.mxu0 0.0
        %372 = vmatpush2.msra.mxu0 0.0
        %373 = vmatprep.subr.mxu0 0.0
        %374 = vmatpush2.msra.mxu0 0.0
        %375 = vmatprep.subr.mxu0 0.0
        %376 = vmatpush2.msra.mxu0 0.0
        %377 = vmatprep.subr.mxu0 0.0
        %378 = vmatpush2.msra.mxu0 0.0
        %379 = vmatprep.subr.mxu0 0.0
        %380 = vmatpush2.msra.mxu0 0.0
        %381 = vmatprep.subr.mxu0 0.0
        %382 = vmatpush2.msra.mxu0 0.0
        %383 = vmatprep.subr.mxu0 0.0
        %384 = vmatpush2.msra.mxu0 0.0
        %385 = vmatprep.subr.mxu0 0.0
        %386 = vmatpush2.msra.mxu0 0.0
        %387 = vmatprep.subr.mxu0 0.0
        %388 = vmatpush2.msra.mxu0 0.0
        %389 = vmatprep.subr.mxu0 0.0
        %390 = vmatpush2.msra.mxu0 0.0
        %391 = vmatprep.subr.mxu0 0.0
        %392 = vmatpush2.msra.mxu0 0.0
        %393 = vmatprep.subr.mxu0 0.0
        %394 = vmatpush2.msra.mxu0 0.0
        %395 = vmatprep.subr.mxu0 0.0
        %396 = vmatpush2.msra.mxu0 0.0
        %397 = vmatprep.subr.mxu0 0.0
        %398 = vmatpush2.msra.mxu0 0.0
        %399 = vmatprep.subr.mxu0 0.0
        %400 = vmatpush2.msra.mxu0 0.0
        %401 = vmatprep.mubr.f32.mxu0 0.0
        %402 = vmatmul.mubr.f32.gmra.mxu0 %v335
        %v403 = vpop.f32.mrf.mxu0
        %v404 = vadd.f32 %v331, %v403
        %v405 = vpop.f32.mrf.mxu0
        %v406 = vadd.f32 %v331, %v405
        %407 = vdwg.mxu0
        %v410 = vcombine.low %v404, %v406
        %412 = vst [vmem:[%s228] sm:$0xff] %v410
        %s413 = sand.u32 %s119, 1
        %s414 = scalar_lea.sflag [#allocation4], %s413
        %s415 = sand.u32 %s119, 1
        %s416 = smul.addr %s415, 8
        %s417 = scalar_lea.vmem [#allocation7], %s416
        // Predicated region
        $region45: #{tpu_custom_call.1} parent=35 // pred_check
          %p418 = pneg %p129
        $region46: #{tpu_custom_call.1} parent=35 // pred_check_branch
          %420 = sbr.rel (%p418) target = $region48
        $region47: #{tpu_custom_call.1} parent=35 // pred_region
          %s421 = smul.u32 2, %s22
          %s423 = ssub.s32 128, 128
          %424 = vsyncadd %s414, %s423
          %s425 = smul.addr %s421, 64
          %s426 = scalar_lea.hbm %s4, %s425
          %s428 = sshll.u32 %s417, 4
          %s429 = int_to_ptr.vmem [resolvable:$true] %s428
          %431 = dma.vmem_to_hbm [thread:$0]  %s429, 128, %s426, %s414
        $region48: #{tpu_custom_call.1} parent=35 // pred_fallthru
          _
      $region36: #{tpu_custom_call.1} parent=5 // pred_fallthru
        _
      %p432 = scmp.le.s32.totalorder 2, %s17
      // Predicated region
      $region49: #{tpu_custom_call.1} parent=5 // pred_check
        %p433 = pneg %p432
      $region50: #{tpu_custom_call.1} parent=5 // pred_check_branch
        %435 = sbr.rel (%p433) target = $region52
      $region51: #{tpu_custom_call.1} parent=5 // pred_region
        %s436 = ssub.s32 %s17, 2
        // Predicated region
        $region53: #{tpu_custom_call.1} parent=51 // pred_check
          %p437 = pneg %p135
        $region54: #{tpu_custom_call.1} parent=51 // pred_check_branch
          %439 = sbr.rel (%p437) target = $region56
        $region55: #{tpu_custom_call.1} parent=51 // pred_region
          %s440 = sand.u32 %s120, 1
          %s441 = scalar_lea.sflag [#allocation4], %s440
          %s442 = sand.u32 %s120, 1
          %s443 = smul.addr %s442, 8
          %s444 = scalar_lea.vmem [#allocation7], %s443
          %445 = dma.done %s441, 128
        $region56: #{tpu_custom_call.1} parent=51 // pred_fallthru
          _
      $region52: #{tpu_custom_call.1} parent=5 // pred_fallthru
        _
    $region6: #{tpu_custom_call.1} parent=1 // loop_footer
      %s21 = sadd.s32 1, %s17
    $region7: #{tpu_custom_call.1} parent=1 // loop_footer_branch
      %16 = sbr.rel target = $region3
    $region8: #{tpu_custom_call.1} parent=1 // loop_exit
      _
    %446 = vsyncpa [#allocation3], 1
    %s447 = scalar_lea.sflag [#allocation3], 1
    %448 = vsyncpa %s447, 1
    %449 = vsyncpa [#allocation6], 1
    %450 = vsyncpa [#allocation4], 1
    %s451 = scalar_lea.sflag [#allocation4], 1
    %452 = vsyncpa %s451, 1

</llo_original>
